<compile_context>
chip_gen: v6e
topology: v6e:2x2x1
jax: 0.10.0
libtpu: 0.0.40
codegen_flags: <defaults>
</compile_context>

<pallas_src>
import functools

import jax
import jax.numpy as jnp
import numpy as np
from jax.experimental import pallas as pl
from jax.experimental.pallas import tpu as pltpu

POOL_SIZES = (5, 9, 13)   # module default; SPPF cascade of 5x5 pools reproduces them


def _vmem_budget_bytes():
    """Conservative, generation-aware per-step VMEM budget for tile picking."""
    try:
        cap = int(pltpu.get_tpu_info().vmem_capacity_bytes)
    except Exception:
        cap = 64 * 1024 * 1024          # conservative fallback: v7x physical VMEM
    return min(cap // 4, 32 * 1024 * 1024)


def _pick_tile_c(n, c, hw, itemsize, vmem_budget):
    """Channels per grid step: fits VMEM, keeps sublane-aligned stores, and
    prefers >= 4 total grid steps (pipelining + megacore), >= 2 minimum."""

    def ws_bytes(tc):
        # double-buffered input block + double-buffered 4-slab output block
        # + ~4 live (tc, hw) temporaries inside the kernel
        return (2 * 1 + 2 * 4 + 4) * tc * hw * itemsize

    # Divisors of C that are multiples of 8 (unmasked sublane stores), plus C
    # itself as the fallback for small / awkward channel counts.
    cands = [d for d in range(c, 0, -1) if c % d == 0 and (d % 8 == 0 or d == c)]
    fitting = [d for d in cands if ws_bytes(d) <= vmem_budget]
    if not fitting:
        # TODO(synk): also tile the flattened H*W axis if even the smallest
        # channel tile exceeds the VMEM budget (very large feature maps).
        fitting = [min(cands)]
    for min_steps in (4, 2, 1):
        for d in fitting:                       # descending: biggest tile first
            if n * (c // d) >= min_steps:
                return d
    return fitting[-1]


def _build_shift_masks(h, w, dtype):
    """Additive 0/-inf masks killing out-of-image taps of the rolled copies.

    Order: [W shifts -2,-1,+1,+2, then H shifts -2,-1,+1,+2].  Shape (8,1,H*W)
    so the kernel broadcasts them over the channel (sublane) axis.
    """
    hw = h * w
    idx = np.arange(hw)
    wi, ri = idx % w, idx // w
    rows = []
    for d in (-2, -1, 1, 2):                    # shift along W -> lane offset d
        valid = (wi + d >= 0) & (wi + d < w)
        rows.append(np.where(valid, 0.0, -np.inf))
    for d in (-2, -1, 1, 2):                    # shift along H -> lane offset d*W
        valid = (ri + d >= 0) & (ri + d < h)
        rows.append(np.where(valid, 0.0, -np.inf))
    m = np.stack(rows).astype(np.float32).reshape(8, 1, hw)
    return jnp.asarray(m, dtype=dtype)


def _spp_kernel(mask_ref, x_ref, out_ref, *, w):
    # mask_ref: (8, 1, HW)     additive 0/-inf boundary masks (see above)
    # x_ref:    (1, TC, HW)    input channel tile, spatial flattened on lanes
    # out_ref:  (1, 4, TC, HW) fused output slabs [pool13, pool9, pool5, x]
    hw = x_ref.shape[-1]
    row_off = (-2, -1, 1, 2)                    # element offsets along W
    col_off = (-2 * w, -w, w, 2 * w)            # element offsets along H (rows)

    def pool5(v):
        # Separable 5x5 stride-1 "same" max pool.  Shifted copies come from the
        # XLU (pltpu.roll along the lane axis); taps that would cross a row /
        # image boundary are driven to -inf by the additive masks.
        acc = v
        for k, d in enumerate(row_off):
            sh = pltpu.roll(v, (-d) % hw, 1)    # sh[i] = v[i + d]
            acc = jnp.maximum(acc, sh + mask_ref[k])
        out = acc
        for k, d in enumerate(col_off):
            sh = pltpu.roll(acc, (-d) % hw, 1)  # sh[i] = acc[i + d]
            out = jnp.maximum(out, sh + mask_ref[4 + k])
        return out

    xv = x_ref[0]
    out_ref[0, 3] = xv           # identity slab (module concatenates x last)
    y5 = pool5(xv)               # == MaxPool2d(5, 1, 2)(x)
    out_ref[0, 2] = y5
    y9 = pool5(y5)               # == MaxPool2d(9, 1, 4)(x)  (exact SPPF cascade)
    out_ref[0, 1] = y9
    out_ref[0, 0] = pool5(y9)    # == MaxPool2d(13, 1, 6)(x)


def spp_pallas(x):
    """x: (N, C, H, W) float -> (N, 4*C, H, W) with channels [p13, p9, p5, x]."""
    n, c, h, w = x.shape
    hw = h * w
    dt = x.dtype
    isz = x.dtype.itemsize
    # TODO(synk): integer dtypes would need dtype-min masks instead of -inf.

    xf = x.reshape(n, c, hw)                    # free reshape (contiguous merge)
    masks = _build_shift_masks(h, w, dt)        # (8, 1, HW), tiny

    budget = _vmem_budget_bytes()
    tile_c = _pick_tile_c(n, c, hw, isz, budget)
    grid = (n, c // tile_c)

    ws = (14 * tile_c + 2 * 8) * hw * isz       # per-step working-set estimate
    vmem_limit = int(min(2 * budget, max(int(1.3 * ws), 16 * 1024 * 1024)))

    out = pl.pallas_call(
        functools.partial(_spp_kernel, w=w),
        out_shape=jax.ShapeDtypeStruct((n, 4, c, hw), dt),
        grid_spec=pltpu.PrefetchScalarGridSpec(
            num_scalar_prefetch=0,
            grid=grid,
            in_specs=[
                pl.BlockSpec((8, 1, hw), lambda i, j: (0, 0, 0)),
                pl.BlockSpec((1, tile_c, hw), lambda i, j: (i, j, 0)),
            ],
            out_specs=pl.BlockSpec((1, 4, tile_c, hw), lambda i, j: (i, 0, j, 0)),
        ),
        compiler_params=pltpu.CompilerParams(
            dimension_semantics=("parallel", "parallel"),
            vmem_limit_bytes=vmem_limit,
        ),
    )(masks, xf)

    # Free reshape back to NCHW with the PyTorch channel order [p13, p9, p5, x].
    return out.reshape(n, 4 * c, h, w)


def _spp_reference(x):
    """Pure-JAX reference using reduce_window (sanity check)."""
    def maxpool(v, k):
        p = k // 2
        return jax.lax.reduce_window(
            v, -jnp.inf, jax.lax.max,
            window_dimensions=(1, 1, k, k),
            window_strides=(1, 1, 1, 1),
            padding=((0, 0), (0, 0), (p, p), (p, p)),
        )
    feats = [maxpool(x, k) for k in POOL_SIZES[::-1]] + [x]
    return jnp.concatenate(feats, axis=1)


if __name__ == "__main__":
    key = jax.random.PRNGKey(0)
    N, C, H, W = 2, 4, 16, 16
    x = jax.random.normal(key, (N, C, H, W), dtype=jnp.float32)

    out = jax.block_until_ready(spp_pallas(x))
    ref = _spp_reference(x)

    assert out.shape == (N, 4 * C, H, W), out.shape
    assert jnp.allclose(out, ref, atol=1e-6, rtol=1e-6), "mismatch vs reference"

    print("KERNEL_OK")
</pallas_src>

<mosaic_0001>
module attributes {stable_mosaic.version = 11 : i64} {
  func.func @_spp_kernel(%arg0: i32, %arg1: i32, %arg2: memref<8x1x256xf32, #tpu.memory_space<vmem>>, %arg3: memref<1x4x256xf32, #tpu.memory_space<vmem>>, %arg4: memref<1x4x4x256xf32, #tpu.memory_space<vmem>>) attributes {dimension_semantics = [#tpu.dimension_semantics<parallel>, #tpu.dimension_semantics<parallel>], iteration_bounds = array<i64: 2, 1>, scalar_prefetch = 0 : i64, scratch_operands = 0 : i64, tpu.core_type = #tpu.core_type<tc>, window_params = [{pipeline_mode = #tpu.pipeline_mode<synchronous>, transform_indices = @transform_0, window_bounds = array<i64: 8, 1, 256>}, {transform_indices = @transform_1, window_bounds = array<i64: 1, 4, 256>}, {transform_indices = @transform_2, window_bounds = array<i64: 1, 4, 4, 256>}]} {
    %c0 = arith.constant 0 : index
    %c0_0 = arith.constant 0 : index
    %c0_1 = arith.constant 0 : index
    %0 = vector.load %arg3[%c0, %c0_0, %c0_1] : memref<1x4x256xf32, #tpu.memory_space<vmem>>, vector<1x4x256xf32>
    %1 = vector.shape_cast %0 : vector<1x4x256xf32> to vector<4x256xf32>
    %c0_2 = arith.constant 0 : index
    %c3 = arith.constant 3 : index
    %c0_3 = arith.constant 0 : index
    %c0_4 = arith.constant 0 : index
    %2 = vector.load %arg4[%c0_2, %c3, %c0_3, %c0_4] : memref<1x4x4x256xf32, #tpu.memory_space<vmem>>, vector<1x1x4x256xf32>
    %3 = vector.shape_cast %2 : vector<1x1x4x256xf32> to vector<4x256xf32>
    %4 = vector.shape_cast %1 : vector<4x256xf32> to vector<1x1x4x256xf32>
    tpu.vector_store %arg4[%c0_2, %c3, %c0_3, %c0_4], %4 {strides = array<i32>} : memref<1x4x4x256xf32, #tpu.memory_space<vmem>>, vector<1x1x4x256xf32>,
    %c2_i32 = arith.constant 2 : i32
    %5 = tpu.dynamic_rotate %1 by %c2_i32 dim 1 : vector<4x256xf32>, i32 -> vector<4x256xf32>
    %c0_5 = arith.constant 0 : index
    %c0_6 = arith.constant 0 : index
    %c0_7 = arith.constant 0 : index
    %6 = vector.load %arg2[%c0_5, %c0_6, %c0_7] : memref<8x1x256xf32, #tpu.memory_space<vmem>>, vector<1x1x256xf32>
    %7 = vector.shape_cast %6 : vector<1x1x256xf32> to vector<1x256xf32>
    %8 = vector.broadcast %7 : vector<1x256xf32> to vector<4x256xf32>
    %9 = arith.addf %5, %8 : vector<4x256xf32>
    %10 = arith.maximumf %1, %9 : vector<4x256xf32>
    %c1_i32 = arith.constant 1 : i32
    %11 = tpu.dynamic_rotate %1 by %c1_i32 dim 1 : vector<4x256xf32>, i32 -> vector<4x256xf32>
    %c1 = arith.constant 1 : index
    %c0_8 = arith.constant 0 : index
    %c0_9 = arith.constant 0 : index
    %12 = vector.load %arg2[%c1, %c0_8, %c0_9] : memref<8x1x256xf32, #tpu.memory_space<vmem>>, vector<1x1x256xf32>
    %13 = vector.shape_cast %12 : vector<1x1x256xf32> to vector<1x256xf32>
    %14 = vector.broadcast %13 : vector<1x256xf32> to vector<4x256xf32>
    %15 = arith.addf %11, %14 : vector<4x256xf32>
    %16 = arith.maximumf %10, %15 : vector<4x256xf32>
    %c255_i32 = arith.constant 255 : i32
    %17 = tpu.dynamic_rotate %1 by %c255_i32 dim 1 : vector<4x256xf32>, i32 -> vector<4x256xf32>
    %c2 = arith.constant 2 : index
    %c0_10 = arith.constant 0 : index
    %c0_11 = arith.constant 0 : index
    %18 = vector.load %arg2[%c2, %c0_10, %c0_11] : memref<8x1x256xf32, #tpu.memory_space<vmem>>, vector<1x1x256xf32>
    %19 = vector.shape_cast %18 : vector<1x1x256xf32> to vector<1x256xf32>
    %20 = vector.broadcast %19 : vector<1x256xf32> to vector<4x256xf32>
    %21 = arith.addf %17, %20 : vector<4x256xf32>
    %22 = arith.maximumf %16, %21 : vector<4x256xf32>
    %c254_i32 = arith.constant 254 : i32
    %23 = tpu.dynamic_rotate %1 by %c254_i32 dim 1 : vector<4x256xf32>, i32 -> vector<4x256xf32>
    %c3_12 = arith.constant 3 : index
    %c0_13 = arith.constant 0 : index
    %c0_14 = arith.constant 0 : index
    %24 = vector.load %arg2[%c3_12, %c0_13, %c0_14] : memref<8x1x256xf32, #tpu.memory_space<vmem>>, vector<1x1x256xf32>
    %25 = vector.shape_cast %24 : vector<1x1x256xf32> to vector<1x256xf32>
    %26 = vector.broadcast %25 : vector<1x256xf32> to vector<4x256xf32>
    %27 = arith.addf %23, %26 : vector<4x256xf32>
    %28 = arith.maximumf %22, %27 : vector<4x256xf32>
    %c32_i32 = arith.constant 32 : i32
    %29 = tpu.dynamic_rotate %28 by %c32_i32 dim 1 : vector<4x256xf32>, i32 -> vector<4x256xf32>
    %c4 = arith.constant 4 : index
    %c0_15 = arith.constant 0 : index
    %c0_16 = arith.constant 0 : index
    %30 = vector.load %arg2[%c4, %c0_15, %c0_16] : memref<8x1x256xf32, #tpu.memory_space<vmem>>, vector<1x1x256xf32>
    %31 = vector.shape_cast %30 : vector<1x1x256xf32> to vector<1x256xf32>
    %32 = vector.broadcast %31 : vector<1x256xf32> to vector<4x256xf32>
    %33 = arith.addf %29, %32 : vector<4x256xf32>
    %34 = arith.maximumf %28, %33 : vector<4x256xf32>
    %c16_i32 = arith.constant 16 : i32
    %35 = tpu.dynamic_rotate %28 by %c16_i32 dim 1 : vector<4x256xf32>, i32 -> vector<4x256xf32>
    %c5 = arith.constant 5 : index
    %c0_17 = arith.constant 0 : index
    %c0_18 = arith.constant 0 : index
    %36 = vector.load %arg2[%c5, %c0_17, %c0_18] : memref<8x1x256xf32, #tpu.memory_space<vmem>>, vector<1x1x256xf32>
    %37 = vector.shape_cast %36 : vector<1x1x256xf32> to vector<1x256xf32>
    %38 = vector.broadcast %37 : vector<1x256xf32> to vector<4x256xf32>
    %39 = arith.addf %35, %38 : vector<4x256xf32>
    %40 = arith.maximumf %34, %39 : vector<4x256xf32>
    %c240_i32 = arith.constant 240 : i32
    %41 = tpu.dynamic_rotate %28 by %c240_i32 dim 1 : vector<4x256xf32>, i32 -> vector<4x256xf32>
    %c6 = arith.constant 6 : index
    %c0_19 = arith.constant 0 : index
    %c0_20 = arith.constant 0 : index
    %42 = vector.load %arg2[%c6, %c0_19, %c0_20] : memref<8x1x256xf32, #tpu.memory_space<vmem>>, vector<1x1x256xf32>
    %43 = vector.shape_cast %42 : vector<1x1x256xf32> to vector<1x256xf32>
    %44 = vector.broadcast %43 : vector<1x256xf32> to vector<4x256xf32>
    %45 = arith.addf %41, %44 : vector<4x256xf32>
    %46 = arith.maximumf %40, %45 : vector<4x256xf32>
    %c224_i32 = arith.constant 224 : i32
    %47 = tpu.dynamic_rotate %28 by %c224_i32 dim 1 : vector<4x256xf32>, i32 -> vector<4x256xf32>
    %c7 = arith.constant 7 : index
    %c0_21 = arith.constant 0 : index
    %c0_22 = arith.constant 0 : index
    %48 = vector.load %arg2[%c7, %c0_21, %c0_22] : memref<8x1x256xf32, #tpu.memory_space<vmem>>, vector<1x1x256xf32>
    %49 = vector.shape_cast %48 : vector<1x1x256xf32> to vector<1x256xf32>
    %50 = vector.broadcast %49 : vector<1x256xf32> to vector<4x256xf32>
    %51 = arith.addf %47, %50 : vector<4x256xf32>
    %52 = arith.maximumf %46, %51 : vector<4x256xf32>
    %c0_23 = arith.constant 0 : index
    %c2_24 = arith.constant 2 : index
    %c0_25 = arith.constant 0 : index
    %c0_26 = arith.constant 0 : index
    %53 = vector.load %arg4[%c0_23, %c2_24, %c0_25, %c0_26] : memref<1x4x4x256xf32, #tpu.memory_space<vmem>>, vector<1x1x4x256xf32>
    %54 = vector.shape_cast %53 : vector<1x1x4x256xf32> to vector<4x256xf32>
    %55 = vector.shape_cast %52 : vector<4x256xf32> to vector<1x1x4x256xf32>
    tpu.vector_store %arg4[%c0_23, %c2_24, %c0_25, %c0_26], %55 {strides = array<i32>} : memref<1x4x4x256xf32, #tpu.memory_space<vmem>>, vector<1x1x4x256xf32>,
    %c2_i32_27 = arith.constant 2 : i32
    %56 = tpu.dynamic_rotate %52 by %c2_i32_27 dim 1 : vector<4x256xf32>, i32 -> vector<4x256xf32>
    %c0_28 = arith.constant 0 : index
    %c0_29 = arith.constant 0 : index
    %c0_30 = arith.constant 0 : index
    %57 = vector.load %arg2[%c0_28, %c0_29, %c0_30] : memref<8x1x256xf32, #tpu.memory_space<vmem>>, vector<1x1x256xf32>
    %58 = vector.shape_cast %57 : vector<1x1x256xf32> to vector<1x256xf32>
    %59 = vector.broadcast %58 : vector<1x256xf32> to vector<4x256xf32>
    %60 = arith.addf %56, %59 : vector<4x256xf32>
    %61 = arith.maximumf %52, %60 : vector<4x256xf32>
    %c1_i32_31 = arith.constant 1 : i32
    %62 = tpu.dynamic_rotate %52 by %c1_i32_31 dim 1 : vector<4x256xf32>, i32 -> vector<4x256xf32>
    %c1_32 = arith.constant 1 : index
    %c0_33 = arith.constant 0 : index
    %c0_34 = arith.constant 0 : index
    %63 = vector.load %arg2[%c1_32, %c0_33, %c0_34] : memref<8x1x256xf32, #tpu.memory_space<vmem>>, vector<1x1x256xf32>
    %64 = vector.shape_cast %63 : vector<1x1x256xf32> to vector<1x256xf32>
    %65 = vector.broadcast %64 : vector<1x256xf32> to vector<4x256xf32>
    %66 = arith.addf %62, %65 : vector<4x256xf32>
    %67 = arith.maximumf %61, %66 : vector<4x256xf32>
    %c255_i32_35 = arith.constant 255 : i32
    %68 = tpu.dynamic_rotate %52 by %c255_i32_35 dim 1 : vector<4x256xf32>, i32 -> vector<4x256xf32>
    %c2_36 = arith.constant 2 : index
    %c0_37 = arith.constant 0 : index
    %c0_38 = arith.constant 0 : index
    %69 = vector.load %arg2[%c2_36, %c0_37, %c0_38] : memref<8x1x256xf32, #tpu.memory_space<vmem>>, vector<1x1x256xf32>
    %70 = vector.shape_cast %69 : vector<1x1x256xf32> to vector<1x256xf32>
    %71 = vector.broadcast %70 : vector<1x256xf32> to vector<4x256xf32>
    %72 = arith.addf %68, %71 : vector<4x256xf32>
    %73 = arith.maximumf %67, %72 : vector<4x256xf32>
    %c254_i32_39 = arith.constant 254 : i32
    %74 = tpu.dynamic_rotate %52 by %c254_i32_39 dim 1 : vector<4x256xf32>, i32 -> vector<4x256xf32>
    %c3_40 = arith.constant 3 : index
    %c0_41 = arith.constant 0 : index
    %c0_42 = arith.constant 0 : index
    %75 = vector.load %arg2[%c3_40, %c0_41, %c0_42] : memref<8x1x256xf32, #tpu.memory_space<vmem>>, vector<1x1x256xf32>
    %76 = vector.shape_cast %75 : vector<1x1x256xf32> to vector<1x256xf32>
    %77 = vector.broadcast %76 : vector<1x256xf32> to vector<4x256xf32>
    %78 = arith.addf %74, %77 : vector<4x256xf32>
    %79 = arith.maximumf %73, %78 : vector<4x256xf32>
    %c32_i32_43 = arith.constant 32 : i32
    %80 = tpu.dynamic_rotate %79 by %c32_i32_43 dim 1 : vector<4x256xf32>, i32 -> vector<4x256xf32>
    %c4_44 = arith.constant 4 : index
    %c0_45 = arith.constant 0 : index
    %c0_46 = arith.constant 0 : index
    %81 = vector.load %arg2[%c4_44, %c0_45, %c0_46] : memref<8x1x256xf32, #tpu.memory_space<vmem>>, vector<1x1x256xf32>
    %82 = vector.shape_cast %81 : vector<1x1x256xf32> to vector<1x256xf32>
    %83 = vector.broadcast %82 : vector<1x256xf32> to vector<4x256xf32>
    %84 = arith.addf %80, %83 : vector<4x256xf32>
    %85 = arith.maximumf %79, %84 : vector<4x256xf32>
    %c16_i32_47 = arith.constant 16 : i32
    %86 = tpu.dynamic_rotate %79 by %c16_i32_47 dim 1 : vector<4x256xf32>, i32 -> vector<4x256xf32>
    %c5_48 = arith.constant 5 : index
    %c0_49 = arith.constant 0 : index
    %c0_50 = arith.constant 0 : index
    %87 = vector.load %arg2[%c5_48, %c0_49, %c0_50] : memref<8x1x256xf32, #tpu.memory_space<vmem>>, vector<1x1x256xf32>
    %88 = vector.shape_cast %87 : vector<1x1x256xf32> to vector<1x256xf32>
    %89 = vector.broadcast %88 : vector<1x256xf32> to vector<4x256xf32>
    %90 = arith.addf %86, %89 : vector<4x256xf32>
    %91 = arith.maximumf %85, %90 : vector<4x256xf32>
    %c240_i32_51 = arith.constant 240 : i32
    %92 = tpu.dynamic_rotate %79 by %c240_i32_51 dim 1 : vector<4x256xf32>, i32 -> vector<4x256xf32>
    %c6_52 = arith.constant 6 : index
    %c0_53 = arith.constant 0 : index
    %c0_54 = arith.constant 0 : index
    %93 = vector.load %arg2[%c6_52, %c0_53, %c0_54] : memref<8x1x256xf32, #tpu.memory_space<vmem>>, vector<1x1x256xf32>
    %94 = vector.shape_cast %93 : vector<1x1x256xf32> to vector<1x256xf32>
    %95 = vector.broadcast %94 : vector<1x256xf32> to vector<4x256xf32>
    %96 = arith.addf %92, %95 : vector<4x256xf32>
    %97 = arith.maximumf %91, %96 : vector<4x256xf32>
    %c224_i32_55 = arith.constant 224 : i32
    %98 = tpu.dynamic_rotate %79 by %c224_i32_55 dim 1 : vector<4x256xf32>, i32 -> vector<4x256xf32>
    %c7_56 = arith.constant 7 : index
    %c0_57 = arith.constant 0 : index
    %c0_58 = arith.constant 0 : index
    %99 = vector.load %arg2[%c7_56, %c0_57, %c0_58] : memref<8x1x256xf32, #tpu.memory_space<vmem>>, vector<1x1x256xf32>
    %100 = vector.shape_cast %99 : vector<1x1x256xf32> to vector<1x256xf32>
    %101 = vector.broadcast %100 : vector<1x256xf32> to vector<4x256xf32>
    %102 = arith.addf %98, %101 : vector<4x256xf32>
    %103 = arith.maximumf %97, %102 : vector<4x256xf32>
    %c0_59 = arith.constant 0 : index
    %c1_60 = arith.constant 1 : index
    %c0_61 = arith.constant 0 : index
    %c0_62 = arith.constant 0 : index
    %104 = vector.load %arg4[%c0_59, %c1_60, %c0_61, %c0_62] : memref<1x4x4x256xf32, #tpu.memory_space<vmem>>, vector<1x1x4x256xf32>
    %105 = vector.shape_cast %104 : vector<1x1x4x256xf32> to vector<4x256xf32>
    %106 = vector.shape_cast %103 : vector<4x256xf32> to vector<1x1x4x256xf32>
    tpu.vector_store %arg4[%c0_59, %c1_60, %c0_61, %c0_62], %106 {strides = array<i32>} : memref<1x4x4x256xf32, #tpu.memory_space<vmem>>, vector<1x1x4x256xf32>,
    %c2_i32_63 = arith.constant 2 : i32
    %107 = tpu.dynamic_rotate %103 by %c2_i32_63 dim 1 : vector<4x256xf32>, i32 -> vector<4x256xf32>
    %c0_64 = arith.constant 0 : index
    %c0_65 = arith.constant 0 : index
    %c0_66 = arith.constant 0 : index
    %108 = vector.load %arg2[%c0_64, %c0_65, %c0_66] : memref<8x1x256xf32, #tpu.memory_space<vmem>>, vector<1x1x256xf32>
    %109 = vector.shape_cast %108 : vector<1x1x256xf32> to vector<1x256xf32>
    %110 = vector.broadcast %109 : vector<1x256xf32> to vector<4x256xf32>
    %111 = arith.addf %107, %110 : vector<4x256xf32>
    %112 = arith.maximumf %103, %111 : vector<4x256xf32>
    %c1_i32_67 = arith.constant 1 : i32
    %113 = tpu.dynamic_rotate %103 by %c1_i32_67 dim 1 : vector<4x256xf32>, i32 -> vector<4x256xf32>
    %c1_68 = arith.constant 1 : index
    %c0_69 = arith.constant 0 : index
    %c0_70 = arith.constant 0 : index
    %114 = vector.load %arg2[%c1_68, %c0_69, %c0_70] : memref<8x1x256xf32, #tpu.memory_space<vmem>>, vector<1x1x256xf32>
    %115 = vector.shape_cast %114 : vector<1x1x256xf32> to vector<1x256xf32>
    %116 = vector.broadcast %115 : vector<1x256xf32> to vector<4x256xf32>
    %117 = arith.addf %113, %116 : vector<4x256xf32>
    %118 = arith.maximumf %112, %117 : vector<4x256xf32>
    %c255_i32_71 = arith.constant 255 : i32
    %119 = tpu.dynamic_rotate %103 by %c255_i32_71 dim 1 : vector<4x256xf32>, i32 -> vector<4x256xf32>
    %c2_72 = arith.constant 2 : index
    %c0_73 = arith.constant 0 : index
    %c0_74 = arith.constant 0 : index
    %120 = vector.load %arg2[%c2_72, %c0_73, %c0_74] : memref<8x1x256xf32, #tpu.memory_space<vmem>>, vector<1x1x256xf32>
    %121 = vector.shape_cast %120 : vector<1x1x256xf32> to vector<1x256xf32>
    %122 = vector.broadcast %121 : vector<1x256xf32> to vector<4x256xf32>
    %123 = arith.addf %119, %122 : vector<4x256xf32>
    %124 = arith.maximumf %118, %123 : vector<4x256xf32>
    %c254_i32_75 = arith.constant 254 : i32
    %125 = tpu.dynamic_rotate %103 by %c254_i32_75 dim 1 : vector<4x256xf32>, i32 -> vector<4x256xf32>
    %c3_76 = arith.constant 3 : index
    %c0_77 = arith.constant 0 : index
    %c0_78 = arith.constant 0 : index
    %126 = vector.load %arg2[%c3_76, %c0_77, %c0_78] : memref<8x1x256xf32, #tpu.memory_space<vmem>>, vector<1x1x256xf32>
    %127 = vector.shape_cast %126 : vector<1x1x256xf32> to vector<1x256xf32>
    %128 = vector.broadcast %127 : vector<1x256xf32> to vector<4x256xf32>
    %129 = arith.addf %125, %128 : vector<4x256xf32>
    %130 = arith.maximumf %124, %129 : vector<4x256xf32>
    %c32_i32_79 = arith.constant 32 : i32
    %131 = tpu.dynamic_rotate %130 by %c32_i32_79 dim 1 : vector<4x256xf32>, i32 -> vector<4x256xf32>
    %c4_80 = arith.constant 4 : index
    %c0_81 = arith.constant 0 : index
    %c0_82 = arith.constant 0 : index
    %132 = vector.load %arg2[%c4_80, %c0_81, %c0_82] : memref<8x1x256xf32, #tpu.memory_space<vmem>>, vector<1x1x256xf32>
    %133 = vector.shape_cast %132 : vector<1x1x256xf32> to vector<1x256xf32>
    %134 = vector.broadcast %133 : vector<1x256xf32> to vector<4x256xf32>
    %135 = arith.addf %131, %134 : vector<4x256xf32>
    %136 = arith.maximumf %130, %135 : vector<4x256xf32>
    %c16_i32_83 = arith.constant 16 : i32
    %137 = tpu.dynamic_rotate %130 by %c16_i32_83 dim 1 : vector<4x256xf32>, i32 -> vector<4x256xf32>
    %c5_84 = arith.constant 5 : index
    %c0_85 = arith.constant 0 : index
    %c0_86 = arith.constant 0 : index
    %138 = vector.load %arg2[%c5_84, %c0_85, %c0_86] : memref<8x1x256xf32, #tpu.memory_space<vmem>>, vector<1x1x256xf32>
    %139 = vector.shape_cast %138 : vector<1x1x256xf32> to vector<1x256xf32>
    %140 = vector.broadcast %139 : vector<1x256xf32> to vector<4x256xf32>
    %141 = arith.addf %137, %140 : vector<4x256xf32>
    %142 = arith.maximumf %136, %141 : vector<4x256xf32>
    %c240_i32_87 = arith.constant 240 : i32
    %143 = tpu.dynamic_rotate %130 by %c240_i32_87 dim 1 : vector<4x256xf32>, i32 -> vector<4x256xf32>
    %c6_88 = arith.constant 6 : index
    %c0_89 = arith.constant 0 : index
    %c0_90 = arith.constant 0 : index
    %144 = vector.load %arg2[%c6_88, %c0_89, %c0_90] : memref<8x1x256xf32, #tpu.memory_space<vmem>>, vector<1x1x256xf32>
    %145 = vector.shape_cast %144 : vector<1x1x256xf32> to vector<1x256xf32>
    %146 = vector.broadcast %145 : vector<1x256xf32> to vector<4x256xf32>
    %147 = arith.addf %143, %146 : vector<4x256xf32>
    %148 = arith.maximumf %142, %147 : vector<4x256xf32>
    %c224_i32_91 = arith.constant 224 : i32
    %149 = tpu.dynamic_rotate %130 by %c224_i32_91 dim 1 : vector<4x256xf32>, i32 -> vector<4x256xf32>
    %c7_92 = arith.constant 7 : index
    %c0_93 = arith.constant 0 : index
    %c0_94 = arith.constant 0 : index
    %150 = vector.load %arg2[%c7_92, %c0_93, %c0_94] : memref<8x1x256xf32, #tpu.memory_space<vmem>>, vector<1x1x256xf32>
    %151 = vector.shape_cast %150 : vector<1x1x256xf32> to vector<1x256xf32>
    %152 = vector.broadcast %151 : vector<1x256xf32> to vector<4x256xf32>
    %153 = arith.addf %149, %152 : vector<4x256xf32>
    %154 = arith.maximumf %148, %153 : vector<4x256xf32>
    %c0_95 = arith.constant 0 : index
    %c0_96 = arith.constant 0 : index
    %c0_97 = arith.constant 0 : index
    %c0_98 = arith.constant 0 : index
    %155 = vector.load %arg4[%c0_95, %c0_96, %c0_97, %c0_98] : memref<1x4x4x256xf32, #tpu.memory_space<vmem>>, vector<1x1x4x256xf32>
    %156 = vector.shape_cast %155 : vector<1x1x4x256xf32> to vector<4x256xf32>
    %157 = vector.shape_cast %154 : vector<4x256xf32> to vector<1x1x4x256xf32>
    tpu.vector_store %arg4[%c0_95, %c0_96, %c0_97, %c0_98], %157 {strides = array<i32>} : memref<1x4x4x256xf32, #tpu.memory_space<vmem>>, vector<1x1x4x256xf32>,
    return
  }
  func.func @transform_0(%arg0: i32, %arg1: i32) -> (i32, i32, i32) {
    %c0_i32 = arith.constant 0 : i32
    %c0_i32_0 = arith.constant 0 : i32
    %c0_i32_1 = arith.constant 0 : i32
    %c0_i32_2 = arith.constant 0 : i32
    return %c0_i32, %c0_i32_0, %c0_i32_1 : i32, i32, i32
  }
  func.func @transform_1(%arg0: i32, %arg1: i32) -> (i32, i32, i32) {
    %c0_i32 = arith.constant 0 : i32
    %c0_i32_0 = arith.constant 0 : i32
    return %arg0, %arg1, %c0_i32 : i32, i32, i32
  }
  func.func @transform_2(%arg0: i32, %arg1: i32) -> (i32, i32, i32, i32) {
    %c0_i32 = arith.constant 0 : i32
    %c0_i32_0 = arith.constant 0 : i32
    %c0_i32_1 = arith.constant 0 : i32
    return %arg0, %c0_i32, %arg1, %c0_i32_0 : i32, i32, i32, i32
  }
}

</mosaic_0001>

<llo_original>
// kernel: tpu_custom_call.1
$region0: #{tpu_custom_call.1}
  #allocation0 [shape = 'u32[]', space=smem, size = 0x4, offset = 0x4, fixed_abs, tag = 'smem constant byte address 0x4 - core index']
  #allocation1 [shape = 'u32[144,128]{1,0:T(1,128)}', space=vmem, size = 0x12000, scoped, tag = 'internal scratch']
  %s0 = inlined_call_operand.hbm [shape: f32[8,1,256], index: 0, kind: input, shape index: {}]
  %s1 = inlined_call_operand.hbm [shape: f32[2,4,256], index: 1, kind: input, shape index: {}]
  %s2 = inlined_call_operand.hbm [shape: f32[2,4,4,256], index: 2, kind: output, shape index: {}]
  %s3 = sld [smem:[#allocation0]]
  $region49: #{tpu_custom_call.1} parent=0
    _
  %s5 = ssub.s32 1, %s3
  %s6 = scalar_select 0, %s5, %s3
  $region1: #{tpu_custom_call.1} parent=0
    #allocation2 [shape = 'u8[8192]{0}', space=vmem, size = 0x2000, scoped, tag = 'input window, operand 0, single buffered']
    #allocation3 [shape = 's32[2]{0}', space=sflag, size = 0x8, scoped, tag = 'scoped memory for tpu_custom_call.1']
    #allocation4 [shape = 's32[2]{0}', space=sflag, size = 0x8, scoped, tag = 'scoped memory for tpu_custom_call.1']
    #allocation5 [shape = 'u8[8192]{0}', space=vmem, size = 0x2000, scoped, tag = 'input window, operand 1']
    #allocation6 [shape = 's32[2]{0}', space=sflag, size = 0x8, scoped, tag = 'scoped memory for tpu_custom_call.1']
    #allocation7 [shape = 'u8[32768]{0}', space=vmem, size = 0x8000, scoped, tag = 'output window, operand 0']
    %7 = vsyncpa [#allocation3], 0
    %8 = vsyncpa [#allocation6], 0
    %s9 = scalar_lea.sflag [#allocation6], 1
    %10 = vsyncpa %s9, 0
    %11 = vsyncpa [#allocation4], 0
    %s12 = scalar_lea.sflag [#allocation4], 1
    %13 = vsyncpa %s12, 0
    loop: start=0, step=1, limit=4
    $region2: #{tpu_custom_call.1} parent=1 // loop_pre_header
      _
    $region3: #{tpu_custom_call.1} parent=1 // loop_header
      %s15 = sphi 0, %s19
      %p16 = scmp.ge.s32.totalorder %s15, 4
      %s22 = sphi 0, %s34
      %s23 = sphi 0, %s30
      %s24 = sphi 0, %s22
      %s25 = sphi 0, %s23
      %s26 = sphi 0, %s24
      %s27 = sphi 0, %s25
      %s35 = sphi 0, %s35
      %s37 = sphi 0, %s35
      %s38 = sphi 0, %s37
      %s52 = sphi 0, %s38
      %s60 = sphi 0, %s62
      %s63 = sphi 0, %s60
      %s64 = sphi 0, %s63
      %s80 = sphi 0, %s64
      %s88 = sphi 0, %s90
      %s91 = sphi 0, %s88
      %s92 = sphi 0, %s91
      %s108 = sphi 0, %s92
    $region4: #{tpu_custom_call.1} parent=1 // loop_header_branch
      %18 = sbr.rel (%p16) target = $region8
    $region5: #{tpu_custom_call.1} parent=1 // loop_body
      %s20 = ssub.s32 %s15, 1
      %s21 = ssub.s32 %s15, 2
      %s28 = sadd.s32 1, %s23
      %p29 = scmp.ge.s32.totalorder %s28, 1
      %s30 = scalar_select %p29, 0, %s28
      %s31 = sadd.s32 1, %s22
      %s32 = scalar_select %p29, %s31, %s22
      %p33 = scmp.ge.s32.totalorder %s32, 2
      %s34 = scalar_select %p33, 0, %s32
      %s36 = sadd.s32 %s35, 1
      %p39 = scmp.eq.s32.totalorder %s15, 1
      %p40 = scmp.ne.s32.totalorder %s35, %s37
      %p41 = scmp.eq.s32.totalorder %s15, 0
      %p42 = por %p40, %p41
      %p43 = scmp.ne.s32.totalorder %s35, %s37
      %p44 = scmp.eq.s32.totalorder %s20, 1
      %p45 = por %p43, %p44
      %p46 = scmp.ne.s32.totalorder %s37, %s38
      %p47 = scmp.eq.s32.totalorder %s20, 0
      %p48 = por %p46, %p47
      %p49 = scmp.ne.s32.totalorder %s37, %s38
      %p50 = scmp.eq.s32.totalorder %s21, 1
      %p51 = por %p49, %p50
      %p53 = scmp.ne.s32.totalorder %s38, %s52
      %p54 = scmp.eq.s32.totalorder %s21, 0
      %p55 = por %p53, %p54
      %s56 = ssub.s32 %s22, %s34
      %s57 = ssub.s32 %s23, %s30
      %s58 = sor.u32 %s56, %s57
      %p59 = scmp.eq.s32.totalorder %s58, 0
      %s61 = sadd.s32 %s60, 1
      %s62 = scalar_select %p59, %s60, %s61
      %p65 = pneg %p59
      %p66 = scmp.eq.s32.totalorder %s15, 1
      %p67 = por %p65, %p66
      %p68 = scmp.ne.s32.totalorder %s60, %s63
      %p69 = scmp.eq.s32.totalorder %s15, 0
      %p70 = por %p68, %p69
      %p71 = scmp.ne.s32.totalorder %s60, %s63
      %p72 = scmp.eq.s32.totalorder %s20, 1
      %p73 = por %p71, %p72
      %p74 = scmp.ne.s32.totalorder %s63, %s64
      %p75 = scmp.eq.s32.totalorder %s20, 0
      %p76 = por %p74, %p75
      %p77 = scmp.ne.s32.totalorder %s63, %s64
      %p78 = scmp.eq.s32.totalorder %s21, 1
      %p79 = por %p77, %p78
      %p81 = scmp.ne.s32.totalorder %s64, %s80
      %p82 = scmp.eq.s32.totalorder %s21, 0
      %p83 = por %p81, %p82
      %s84 = ssub.s32 %s22, %s34
      %s85 = ssub.s32 %s23, %s30
      %s86 = sor.u32 %s84, %s85
      %p87 = scmp.eq.s32.totalorder %s86, 0
      %s89 = sadd.s32 %s88, 1
      %s90 = scalar_select %p87, %s88, %s89
      %p93 = pneg %p87
      %p94 = scmp.eq.s32.totalorder %s15, 1
      %p95 = por %p93, %p94
      %p96 = scmp.ne.s32.totalorder %s88, %s91
      %p97 = scmp.eq.s32.totalorder %s15, 0
      %p98 = por %p96, %p97
      %p99 = scmp.ne.s32.totalorder %s88, %s91
      %p100 = scmp.eq.s32.totalorder %s20, 1
      %p101 = por %p99, %p100
      %p102 = scmp.ne.s32.totalorder %s91, %s92
      %p103 = scmp.eq.s32.totalorder %s20, 0
      %p104 = por %p102, %p103
      %p105 = scmp.ne.s32.totalorder %s91, %s92
      %p106 = scmp.eq.s32.totalorder %s21, 1
      %p107 = por %p105, %p106
      %p109 = scmp.ne.s32.totalorder %s92, %s108
      %p110 = scmp.eq.s32.totalorder %s21, 0
      %p111 = por %p109, %p110
      %p112 = scmp.le.s32.totalorder 1, %s15
      %p113 = scmp.lt.s32.totalorder %s15, 3
      %p114 = pnand %p112, %p113
      %p115 = pneg %p114
      // Predicated region
      $region9: #{tpu_custom_call.1} parent=5 // pred_check
        _
      $region10: #{tpu_custom_call.1} parent=5 // pred_check_branch
        %117 = sbr.rel (%p114) target = $region12
      $region11: #{tpu_custom_call.1} parent=5 // pred_region
        %s118 = ssub.s32 %s15, 1
        // Predicated region
        $region13: #{tpu_custom_call.1} parent=11 // pred_check
          %p119 = pneg %p48
        $region14: #{tpu_custom_call.1} parent=11 // pred_check_branch
          %121 = sbr.rel (%p119) target = $region16
        $region15: #{tpu_custom_call.1} parent=11 // pred_region
          %s123 = ssub.s32 256, 256
          %124 = vsyncadd [#allocation3], %s123
          %s125 = sshll.u32 [#allocation2], 4
          %s126 = int_to_ptr.vmem [resolvable:$true] %s125
          %131 = dma.hbm_to_vmem [thread:$0]  %s0, 256, %s126, [#allocation3], 32, 32, 2
        $region16: #{tpu_custom_call.1} parent=11 // pred_fallthru
          _
      $region12: #{tpu_custom_call.1} parent=5 // pred_fallthru
        _
      %p132 = scmp.lt.s32.totalorder %s15, 2
      // Predicated region
      $region17: #{tpu_custom_call.1} parent=5 // pred_check
        %p133 = pneg %p132
      $region18: #{tpu_custom_call.1} parent=5 // pred_check_branch
        %135 = sbr.rel (%p133) target = $region20
      $region19: #{tpu_custom_call.1} parent=5 // pred_region
        // Predicated region
        $region21: #{tpu_custom_call.1} parent=19 // pred_check
          %p136 = pneg %p70
        $region22: #{tpu_custom_call.1} parent=19 // pred_check_branch
          %138 = sbr.rel (%p136) target = $region24
        $region23: #{tpu_custom_call.1} parent=19 // pred_region
          %s139 = sand.u32 %s60, 1
          %s140 = scalar_lea.sflag [#allocation6], %s139
          %s141 = sand.u32 %s60, 1
          %s142 = smul.addr %s141, 8
          %s143 = scalar_lea.vmem [#allocation5], %s142
          %s145 = ssub.s32 128, 128
          %146 = vsyncadd %s140, %s145
          %s147 = smul.addr %s23, 2
          %s148 = smul.addr %s22, 2
          %s149 = sadd.s32 %s147, %s148
          %s150 = smul.addr %s149, 64
          %s151 = scalar_lea.hbm %s1, %s150
          %s153 = sshll.u32 %s143, 4
          %s154 = int_to_ptr.vmem [resolvable:$true] %s153
          %156 = dma.hbm_to_vmem [thread:$0]  %s151, 128, %s154, %s140
        $region24: #{tpu_custom_call.1} parent=19 // pred_fallthru
          _
      $region20: #{tpu_custom_call.1} parent=5 // pred_fallthru
        _
      %p157 = scmp.le.s32.totalorder 1, %s15
      %p158 = scmp.lt.s32.totalorder %s15, 3
      %p159 = pnand %p157, %p158
      %p160 = pneg %p159
      // Predicated region
      $region25: #{tpu_custom_call.1} parent=5 // pred_check
        _
      $region26: #{tpu_custom_call.1} parent=5 // pred_check_branch
        %162 = sbr.rel (%p159) target = $region28
      $region27: #{tpu_custom_call.1} parent=5 // pred_region
        %s163 = ssub.s32 %s15, 1
        // Predicated region
        $region29: #{tpu_custom_call.1} parent=27 // pred_check
          %p164 = pneg %p48
        $region30: #{tpu_custom_call.1} parent=27 // pred_check_branch
          %166 = sbr.rel (%p164) target = $region32
        $region31: #{tpu_custom_call.1} parent=27 // pred_region
          %167 = dma.done [#allocation3], 256
        $region32: #{tpu_custom_call.1} parent=27 // pred_fallthru
          _
        %s168 = sand.u32 %s63, 1
        %s169 = scalar_lea.sflag [#allocation6], %s168
        %s170 = sand.u32 %s63, 1
        %s171 = smul.addr %s170, 8
        %s172 = scalar_lea.vmem [#allocation5], %s171
        // Predicated region
        $region33: #{tpu_custom_call.1} parent=27 // pred_check
          %p173 = pneg %p76
        $region34: #{tpu_custom_call.1} parent=27 // pred_check_branch
          %175 = sbr.rel (%p173) target = $region36
        $region35: #{tpu_custom_call.1} parent=27 // pred_region
          %176 = dma.done %s169, 128
        $region36: #{tpu_custom_call.1} parent=27 // pred_fallthru
          _
        %p177 = pneg %p48
        %p178 = pneg %p45
        %s179 = sand.u32 %s63, 1
        %s180 = scalar_lea.sflag [#allocation6], %s179
        %s181 = sand.u32 %s63, 1
        %s182 = smul.addr %s181, 8
        %s183 = scalar_lea.vmem [#allocation5], %s182
        %p184 = pneg %p76
        %p185 = pneg %p73
        %p186 = pneg %p104
        %p187 = pneg %p101
        %s188 = sand.u32 %s91, 1
        %s189 = scalar_lea.sflag [#allocation4], %s188
        %s190 = sand.u32 %s91, 1
        %s191 = smul.addr %s190, 32
        %s192 = scalar_lea.vmem [#allocation7], %s191
        %v193 = vld [vmem:[%s172] sm:$0xff]
        %s194 = scalar_lea.vmem %s192, 24 [#allocation7]
        %195 = vst [vmem:[%s194] sm:$0xff] %v193
        %v197 = vcombine.high %v193, %v193
        %199 = vrot.lane.b32.xlu0 %v193, 2
        %v200 = vpop.permute.xlu0 %199
        %201 = vrot.lane.b32.xlu0 %v197, 2
        %v202 = vpop.permute.xlu0 %201
        %v203 = vlaneseq
        %v204 = vand.u32 %v203, 127
        %vm205 = vcmp.lt.s32.totalorder %v204, 2
        %v206 = vsel %vm205, %v200, %v202
        %v207 = vsel %vm205, %v202, %v200
        %v208 = vld [vmem:[#allocation2] sm:$0x3]
        %v210 = vlaneseq
        %v211 = vshrl.u32 %v210, 7
        %v212 = vsub.s32 0, %v211
        %v213 = vrot.slane %v208, %v212
        %v214 = vlaneseq
        %v215 = vshrl.u32 %v214, 7
        %v216 = vsub.s32 1, %v215
        %v217 = vrot.slane %v208, %v216
        %v220 = vadd.f32 %v207, %v213
        %v221 = vadd.f32 %v206, %v217
        %v224 = vcombine.low %v220, %v221
        %v226 = vmax.f32 %v193, %v224
        %227 = vrot.lane.b32.xlu0 %v193, 1
        %v228 = vpop.permute.xlu0 %227
        %229 = vrot.lane.b32.xlu0 %v197, 1
        %v230 = vpop.permute.xlu0 %229
        %vm231 = vcmp.lt.s32.totalorder %v204, 1
        %v232 = vsel %vm231, %v228, %v230
        %v233 = vsel %vm231, %v230, %v228
        %s234 = scalar_lea.vmem [#allocation2], 2
        %v235 = vld [vmem:[%s234] sm:$0x3]
        %v237 = vlaneseq
        %v238 = vshrl.u32 %v237, 7
        %v239 = vsub.s32 0, %v238
        %v240 = vrot.slane %v235, %v239
        %v241 = vlaneseq
        %v242 = vshrl.u32 %v241, 7
        %v243 = vsub.s32 1, %v242
        %v244 = vrot.slane %v235, %v243
        %v247 = vadd.f32 %v233, %v240
        %v248 = vadd.f32 %v232, %v244
        %v251 = vcombine.low %v247, %v248
        %v253 = vmax.f32 %v226, %v251
        %254 = vrot.lane.b32.xlu0 %v193, 127
        %v255 = vpop.permute.xlu0 %254
        %256 = vrot.lane.b32.xlu0 %v197, 127
        %v257 = vpop.permute.xlu0 %256
        %vm258 = vcmp.lt.s32.totalorder %v204, 127
        %v259 = vsel %vm258, %v255, %v257
        %v260 = vsel %vm258, %v257, %v255
        %s261 = scalar_lea.vmem [#allocation2], 4
        %v262 = vld [vmem:[%s261] sm:$0x3]
        %v264 = vlaneseq
        %v265 = vshrl.u32 %v264, 7
        %v266 = vsub.s32 0, %v265
        %v267 = vrot.slane %v262, %v266
        %v268 = vlaneseq
        %v269 = vshrl.u32 %v268, 7
        %v270 = vsub.s32 1, %v269
        %v271 = vrot.slane %v262, %v270
        %v274 = vadd.f32 %v259, %v267
        %v275 = vadd.f32 %v260, %v271
        %v278 = vcombine.low %v274, %v275
        %v280 = vmax.f32 %v253, %v278
        %281 = vrot.lane.b32.xlu0 %v193, 126
        %v282 = vpop.permute.xlu0 %281
        %283 = vrot.lane.b32.xlu0 %v197, 126
        %v284 = vpop.permute.xlu0 %283
        %vm285 = vcmp.lt.s32.totalorder %v204, 126
        %v286 = vsel %vm285, %v282, %v284
        %v287 = vsel %vm285, %v284, %v282
        %s288 = scalar_lea.vmem [#allocation2], 6
        %v289 = vld [vmem:[%s288] sm:$0x3]
        %v291 = vlaneseq
        %v292 = vshrl.u32 %v291, 7
        %v293 = vsub.s32 0, %v292
        %v294 = vrot.slane %v289, %v293
        %v295 = vlaneseq
        %v296 = vshrl.u32 %v295, 7
        %v297 = vsub.s32 1, %v296
        %v298 = vrot.slane %v289, %v297
        %v301 = vadd.f32 %v286, %v294
        %v302 = vadd.f32 %v287, %v298
        %v305 = vcombine.low %v301, %v302
        %v307 = vmax.f32 %v280, %v305
        %v309 = vcombine.high %v307, %v307
        %311 = vrot.lane.b32.xlu0 %v307, 32
        %v312 = vpop.permute.xlu0 %311
        %313 = vrot.lane.b32.xlu0 %v309, 32
        %v314 = vpop.permute.xlu0 %313
        %vm315 = vcmp.lt.s32.totalorder %v204, 32
        %v316 = vsel %vm315, %v312, %v314
        %v317 = vsel %vm315, %v314, %v312
        %s318 = scalar_lea.vmem [#allocation2], 8
        %v319 = vld [vmem:[%s318] sm:$0x3]
        %v321 = vlaneseq
        %v322 = vshrl.u32 %v321, 7
        %v323 = vsub.s32 0, %v322
        %v324 = vrot.slane %v319, %v323
        %v325 = vlaneseq
        %v326 = vshrl.u32 %v325, 7
        %v327 = vsub.s32 1, %v326
        %v328 = vrot.slane %v319, %v327
        %v331 = vadd.f32 %v317, %v324
        %v332 = vadd.f32 %v316, %v328
        %v335 = vcombine.low %v331, %v332
        %v337 = vmax.f32 %v307, %v335
        %338 = vrot.lane.b32.xlu0 %v307, 16
        %v339 = vpop.permute.xlu0 %338
        %340 = vrot.lane.b32.xlu0 %v309, 16
        %v341 = vpop.permute.xlu0 %340
        %vm342 = vcmp.lt.s32.totalorder %v204, 16
        %v343 = vsel %vm342, %v339, %v341
        %v344 = vsel %vm342, %v341, %v339
        %s345 = scalar_lea.vmem [#allocation2], 10
        %v346 = vld [vmem:[%s345] sm:$0x3]
        %v348 = vlaneseq
        %v349 = vshrl.u32 %v348, 7
        %v350 = vsub.s32 0, %v349
        %v351 = vrot.slane %v346, %v350
        %v352 = vlaneseq
        %v353 = vshrl.u32 %v352, 7
        %v354 = vsub.s32 1, %v353
        %v355 = vrot.slane %v346, %v354
        %v358 = vadd.f32 %v344, %v351
        %v359 = vadd.f32 %v343, %v355
        %v362 = vcombine.low %v358, %v359
        %v364 = vmax.f32 %v337, %v362
        %365 = vrot.lane.b32.xlu0 %v307, 112
        %v366 = vpop.permute.xlu0 %365
        %367 = vrot.lane.b32.xlu0 %v309, 112
        %v368 = vpop.permute.xlu0 %367
        %vm369 = vcmp.lt.s32.totalorder %v204, 112
        %v370 = vsel %vm369, %v366, %v368
        %v371 = vsel %vm369, %v368, %v366
        %s372 = scalar_lea.vmem [#allocation2], 12
        %v373 = vld [vmem:[%s372] sm:$0x3]
        %v375 = vlaneseq
        %v376 = vshrl.u32 %v375, 7
        %v377 = vsub.s32 0, %v376
        %v378 = vrot.slane %v373, %v377
        %v379 = vlaneseq
        %v380 = vshrl.u32 %v379, 7
        %v381 = vsub.s32 1, %v380
        %v382 = vrot.slane %v373, %v381
        %v385 = vadd.f32 %v370, %v378
        %v386 = vadd.f32 %v371, %v382
        %v389 = vcombine.low %v385, %v386
        %v391 = vmax.f32 %v364, %v389
        %392 = vrot.lane.b32.xlu0 %v307, 96
        %v393 = vpop.permute.xlu0 %392
        %394 = vrot.lane.b32.xlu0 %v309, 96
        %v395 = vpop.permute.xlu0 %394
        %vm396 = vcmp.lt.s32.totalorder %v204, 96
        %v397 = vsel %vm396, %v393, %v395
        %v398 = vsel %vm396, %v395, %v393
        %s399 = scalar_lea.vmem [#allocation2], 14
        %v400 = vld [vmem:[%s399] sm:$0x3]
        %v402 = vlaneseq
        %v403 = vshrl.u32 %v402, 7
        %v404 = vsub.s32 0, %v403
        %v405 = vrot.slane %v400, %v404
        %v406 = vlaneseq
        %v407 = vshrl.u32 %v406, 7
        %v408 = vsub.s32 1, %v407
        %v409 = vrot.slane %v400, %v408
        %v412 = vadd.f32 %v397, %v405
        %v413 = vadd.f32 %v398, %v409
        %v416 = vcombine.low %v412, %v413
        %v418 = vmax.f32 %v391, %v416
        %s419 = scalar_lea.vmem %s192, 16 [#allocation7]
        %420 = vst [vmem:[%s419] sm:$0xff] %v418
        %v422 = vcombine.high %v418, %v418
        %424 = vrot.lane.b32.xlu0 %v418, 2
        %v425 = vpop.permute.xlu0 %424
        %426 = vrot.lane.b32.xlu0 %v422, 2
        %v427 = vpop.permute.xlu0 %426
        %v428 = vsel %vm205, %v425, %v427
        %v429 = vsel %vm205, %v427, %v425
        %v430 = vld [vmem:[#allocation2] sm:$0x3]
        %v432 = vlaneseq
        %v433 = vshrl.u32 %v432, 7
        %v434 = vsub.s32 0, %v433
        %v435 = vrot.slane %v430, %v434
        %v436 = vlaneseq
        %v437 = vshrl.u32 %v436, 7
        %v438 = vsub.s32 1, %v437
        %v439 = vrot.slane %v430, %v438
        %v442 = vadd.f32 %v429, %v435
        %v443 = vadd.f32 %v428, %v439
        %v446 = vcombine.low %v442, %v443
        %v448 = vmax.f32 %v418, %v446
        %449 = vrot.lane.b32.xlu0 %v418, 1
        %v450 = vpop.permute.xlu0 %449
        %451 = vrot.lane.b32.xlu0 %v422, 1
        %v452 = vpop.permute.xlu0 %451
        %v453 = vsel %vm231, %v450, %v452
        %v454 = vsel %vm231, %v452, %v450
        %v455 = vld [vmem:[%s234] sm:$0x3]
        %v457 = vlaneseq
        %v458 = vshrl.u32 %v457, 7
        %v459 = vsub.s32 0, %v458
        %v460 = vrot.slane %v455, %v459
        %v461 = vlaneseq
        %v462 = vshrl.u32 %v461, 7
        %v463 = vsub.s32 1, %v462
        %v464 = vrot.slane %v455, %v463
        %v467 = vadd.f32 %v454, %v460
        %v468 = vadd.f32 %v453, %v464
        %v471 = vcombine.low %v467, %v468
        %v473 = vmax.f32 %v448, %v471
        %474 = vrot.lane.b32.xlu0 %v418, 127
        %v475 = vpop.permute.xlu0 %474
        %476 = vrot.lane.b32.xlu0 %v422, 127
        %v477 = vpop.permute.xlu0 %476
        %v478 = vsel %vm258, %v475, %v477
        %v479 = vsel %vm258, %v477, %v475
        %v480 = vld [vmem:[%s261] sm:$0x3]
        %v482 = vlaneseq
        %v483 = vshrl.u32 %v482, 7
        %v484 = vsub.s32 0, %v483
        %v485 = vrot.slane %v480, %v484
        %v486 = vlaneseq
        %v487 = vshrl.u32 %v486, 7
        %v488 = vsub.s32 1, %v487
        %v489 = vrot.slane %v480, %v488
        %v492 = vadd.f32 %v478, %v485
        %v493 = vadd.f32 %v479, %v489
        %v496 = vcombine.low %v492, %v493
        %v498 = vmax.f32 %v473, %v496
        %499 = vrot.lane.b32.xlu0 %v418, 126
        %v500 = vpop.permute.xlu0 %499
        %501 = vrot.lane.b32.xlu0 %v422, 126
        %v502 = vpop.permute.xlu0 %501
        %v503 = vsel %vm285, %v500, %v502
        %v504 = vsel %vm285, %v502, %v500
        %v505 = vld [vmem:[%s288] sm:$0x3]
        %v507 = vlaneseq
        %v508 = vshrl.u32 %v507, 7
        %v509 = vsub.s32 0, %v508
        %v510 = vrot.slane %v505, %v509
        %v511 = vlaneseq
        %v512 = vshrl.u32 %v511, 7
        %v513 = vsub.s32 1, %v512
        %v514 = vrot.slane %v505, %v513
        %v517 = vadd.f32 %v503, %v510
        %v518 = vadd.f32 %v504, %v514
        %v521 = vcombine.low %v517, %v518
        %v523 = vmax.f32 %v498, %v521
        %v525 = vcombine.high %v523, %v523
        %527 = vrot.lane.b32.xlu0 %v523, 32
        %v528 = vpop.permute.xlu0 %527
        %529 = vrot.lane.b32.xlu0 %v525, 32
        %v530 = vpop.permute.xlu0 %529
        %v531 = vsel %vm315, %v528, %v530
        %v532 = vsel %vm315, %v530, %v528
        %v533 = vld [vmem:[%s318] sm:$0x3]
        %v535 = vlaneseq
        %v536 = vshrl.u32 %v535, 7
        %v537 = vsub.s32 0, %v536
        %v538 = vrot.slane %v533, %v537
        %v539 = vlaneseq
        %v540 = vshrl.u32 %v539, 7
        %v541 = vsub.s32 1, %v540
        %v542 = vrot.slane %v533, %v541
        %v545 = vadd.f32 %v532, %v538
        %v546 = vadd.f32 %v531, %v542
        %v549 = vcombine.low %v545, %v546
        %v551 = vmax.f32 %v523, %v549
        %552 = vrot.lane.b32.xlu0 %v523, 16
        %v553 = vpop.permute.xlu0 %552
        %554 = vrot.lane.b32.xlu0 %v525, 16
        %v555 = vpop.permute.xlu0 %554
        %v556 = vsel %vm342, %v553, %v555
        %v557 = vsel %vm342, %v555, %v553
        %v558 = vld [vmem:[%s345] sm:$0x3]
        %v560 = vlaneseq
        %v561 = vshrl.u32 %v560, 7
        %v562 = vsub.s32 0, %v561
        %v563 = vrot.slane %v558, %v562
        %v564 = vlaneseq
        %v565 = vshrl.u32 %v564, 7
        %v566 = vsub.s32 1, %v565
        %v567 = vrot.slane %v558, %v566
        %v570 = vadd.f32 %v557, %v563
        %v571 = vadd.f32 %v556, %v567
        %v574 = vcombine.low %v570, %v571
        %v576 = vmax.f32 %v551, %v574
        %577 = vrot.lane.b32.xlu0 %v523, 112
        %v578 = vpop.permute.xlu0 %577
        %579 = vrot.lane.b32.xlu0 %v525, 112
        %v580 = vpop.permute.xlu0 %579
        %v581 = vsel %vm369, %v578, %v580
        %v582 = vsel %vm369, %v580, %v578
        %v583 = vld [vmem:[%s372] sm:$0x3]
        %v585 = vlaneseq
        %v586 = vshrl.u32 %v585, 7
        %v587 = vsub.s32 0, %v586
        %v588 = vrot.slane %v583, %v587
        %v589 = vlaneseq
        %v590 = vshrl.u32 %v589, 7
        %v591 = vsub.s32 1, %v590
        %v592 = vrot.slane %v583, %v591
        %v595 = vadd.f32 %v581, %v588
        %v596 = vadd.f32 %v582, %v592
        %v599 = vcombine.low %v595, %v596
        %v601 = vmax.f32 %v576, %v599
        %602 = vrot.lane.b32.xlu0 %v523, 96
        %v603 = vpop.permute.xlu0 %602
        %604 = vrot.lane.b32.xlu0 %v525, 96
        %v605 = vpop.permute.xlu0 %604
        %v606 = vsel %vm396, %v603, %v605
        %v607 = vsel %vm396, %v605, %v603
        %v608 = vld [vmem:[%s399] sm:$0x3]
        %v610 = vlaneseq
        %v611 = vshrl.u32 %v610, 7
        %v612 = vsub.s32 0, %v611
        %v613 = vrot.slane %v608, %v612
        %v614 = vlaneseq
        %v615 = vshrl.u32 %v614, 7
        %v616 = vsub.s32 1, %v615
        %v617 = vrot.slane %v608, %v616
        %v620 = vadd.f32 %v606, %v613
        %v621 = vadd.f32 %v607, %v617
        %v624 = vcombine.low %v620, %v621
        %v626 = vmax.f32 %v601, %v624
        %s627 = scalar_lea.vmem %s192, 8 [#allocation7]
        %628 = vst [vmem:[%s627] sm:$0xff] %v626
        %v630 = vcombine.high %v626, %v626
        %632 = vrot.lane.b32.xlu0 %v626, 2
        %v633 = vpop.permute.xlu0 %632
        %634 = vrot.lane.b32.xlu0 %v630, 2
        %v635 = vpop.permute.xlu0 %634
        %v636 = vsel %vm205, %v633, %v635
        %v637 = vsel %vm205, %v635, %v633
        %v638 = vld [vmem:[#allocation2] sm:$0x3]
        %v640 = vlaneseq
        %v641 = vshrl.u32 %v640, 7
        %v642 = vsub.s32 0, %v641
        %v643 = vrot.slane %v638, %v642
        %v644 = vlaneseq
        %v645 = vshrl.u32 %v644, 7
        %v646 = vsub.s32 1, %v645
        %v647 = vrot.slane %v638, %v646
        %v650 = vadd.f32 %v637, %v643
        %v651 = vadd.f32 %v636, %v647
        %v654 = vcombine.low %v650, %v651
        %v656 = vmax.f32 %v626, %v654
        %657 = vrot.lane.b32.xlu0 %v626, 1
        %v658 = vpop.permute.xlu0 %657
        %659 = vrot.lane.b32.xlu0 %v630, 1
        %v660 = vpop.permute.xlu0 %659
        %v661 = vsel %vm231, %v658, %v660
        %v662 = vsel %vm231, %v660, %v658
        %v663 = vld [vmem:[%s234] sm:$0x3]
        %v665 = vlaneseq
        %v666 = vshrl.u32 %v665, 7
        %v667 = vsub.s32 0, %v666
        %v668 = vrot.slane %v663, %v667
        %v669 = vlaneseq
        %v670 = vshrl.u32 %v669, 7
        %v671 = vsub.s32 1, %v670
        %v672 = vrot.slane %v663, %v671
        %v675 = vadd.f32 %v662, %v668
        %v676 = vadd.f32 %v661, %v672
        %v679 = vcombine.low %v675, %v676
        %v681 = vmax.f32 %v656, %v679
        %682 = vrot.lane.b32.xlu0 %v626, 127
        %v683 = vpop.permute.xlu0 %682
        %684 = vrot.lane.b32.xlu0 %v630, 127
        %v685 = vpop.permute.xlu0 %684
        %v686 = vsel %vm258, %v683, %v685
        %v687 = vsel %vm258, %v685, %v683
        %v688 = vld [vmem:[%s261] sm:$0x3]
        %v690 = vlaneseq
        %v691 = vshrl.u32 %v690, 7
        %v692 = vsub.s32 0, %v691
        %v693 = vrot.slane %v688, %v692
        %v694 = vlaneseq
        %v695 = vshrl.u32 %v694, 7
        %v696 = vsub.s32 1, %v695
        %v697 = vrot.slane %v688, %v696
        %v700 = vadd.f32 %v686, %v693
        %v701 = vadd.f32 %v687, %v697
        %v704 = vcombine.low %v700, %v701
        %v706 = vmax.f32 %v681, %v704
        %707 = vrot.lane.b32.xlu0 %v626, 126
        %v708 = vpop.permute.xlu0 %707
        %709 = vrot.lane.b32.xlu0 %v630, 126
        %v710 = vpop.permute.xlu0 %709
        %v711 = vsel %vm285, %v708, %v710
        %v712 = vsel %vm285, %v710, %v708
        %v713 = vld [vmem:[%s288] sm:$0x3]
        %v715 = vlaneseq
        %v716 = vshrl.u32 %v715, 7
        %v717 = vsub.s32 0, %v716
        %v718 = vrot.slane %v713, %v717
        %v719 = vlaneseq
        %v720 = vshrl.u32 %v719, 7
        %v721 = vsub.s32 1, %v720
        %v722 = vrot.slane %v713, %v721
        %v725 = vadd.f32 %v711, %v718
        %v726 = vadd.f32 %v712, %v722
        %v729 = vcombine.low %v725, %v726
        %v731 = vmax.f32 %v706, %v729
        %v733 = vcombine.high %v731, %v731
        %735 = vrot.lane.b32.xlu0 %v731, 32
        %v736 = vpop.permute.xlu0 %735
        %737 = vrot.lane.b32.xlu0 %v733, 32
        %v738 = vpop.permute.xlu0 %737
        %v739 = vsel %vm315, %v736, %v738
        %v740 = vsel %vm315, %v738, %v736
        %v741 = vld [vmem:[%s318] sm:$0x3]
        %v743 = vlaneseq
        %v744 = vshrl.u32 %v743, 7
        %v745 = vsub.s32 0, %v744
        %v746 = vrot.slane %v741, %v745
        %v747 = vlaneseq
        %v748 = vshrl.u32 %v747, 7
        %v749 = vsub.s32 1, %v748
        %v750 = vrot.slane %v741, %v749
        %v753 = vadd.f32 %v740, %v746
        %v754 = vadd.f32 %v739, %v750
        %v757 = vcombine.low %v753, %v754
        %v759 = vmax.f32 %v731, %v757
        %760 = vrot.lane.b32.xlu0 %v731, 16
        %v761 = vpop.permute.xlu0 %760
        %762 = vrot.lane.b32.xlu0 %v733, 16
        %v763 = vpop.permute.xlu0 %762
        %v764 = vsel %vm342, %v761, %v763
        %v765 = vsel %vm342, %v763, %v761
        %v766 = vld [vmem:[%s345] sm:$0x3]
        %v768 = vlaneseq
        %v769 = vshrl.u32 %v768, 7
        %v770 = vsub.s32 0, %v769
        %v771 = vrot.slane %v766, %v770
        %v772 = vlaneseq
        %v773 = vshrl.u32 %v772, 7
        %v774 = vsub.s32 1, %v773
        %v775 = vrot.slane %v766, %v774
        %v778 = vadd.f32 %v765, %v771
        %v779 = vadd.f32 %v764, %v775
        %v782 = vcombine.low %v778, %v779
        %v784 = vmax.f32 %v759, %v782
        %785 = vrot.lane.b32.xlu0 %v731, 112
        %v786 = vpop.permute.xlu0 %785
        %787 = vrot.lane.b32.xlu0 %v733, 112
        %v788 = vpop.permute.xlu0 %787
        %v789 = vsel %vm369, %v786, %v788
        %v790 = vsel %vm369, %v788, %v786
        %v791 = vld [vmem:[%s372] sm:$0x3]
        %v793 = vlaneseq
        %v794 = vshrl.u32 %v793, 7
        %v795 = vsub.s32 0, %v794
        %v796 = vrot.slane %v791, %v795
        %v797 = vlaneseq
        %v798 = vshrl.u32 %v797, 7
        %v799 = vsub.s32 1, %v798
        %v800 = vrot.slane %v791, %v799
        %v803 = vadd.f32 %v789, %v796
        %v804 = vadd.f32 %v790, %v800
        %v807 = vcombine.low %v803, %v804
        %v809 = vmax.f32 %v784, %v807
        %810 = vrot.lane.b32.xlu0 %v731, 96
        %v811 = vpop.permute.xlu0 %810
        %812 = vrot.lane.b32.xlu0 %v733, 96
        %v813 = vpop.permute.xlu0 %812
        %v814 = vsel %vm396, %v811, %v813
        %v815 = vsel %vm396, %v813, %v811
        %v816 = vld [vmem:[%s399] sm:$0x3]
        %v818 = vlaneseq
        %v819 = vshrl.u32 %v818, 7
        %v820 = vsub.s32 0, %v819
        %v821 = vrot.slane %v816, %v820
        %v822 = vlaneseq
        %v823 = vshrl.u32 %v822, 7
        %v824 = vsub.s32 1, %v823
        %v825 = vrot.slane %v816, %v824
        %v828 = vadd.f32 %v814, %v821
        %v829 = vadd.f32 %v815, %v825
        %v832 = vcombine.low %v828, %v829
        %v834 = vmax.f32 %v809, %v832
        %835 = vst [vmem:[%s192] sm:$0xff] %v834
        %s836 = sand.u32 %s91, 1
        %s837 = scalar_lea.sflag [#allocation4], %s836
        %s838 = sand.u32 %s91, 1
        %s839 = smul.addr %s838, 32
        %s840 = scalar_lea.vmem [#allocation7], %s839
        // Predicated region
        $region37: #{tpu_custom_call.1} parent=27 // pred_check
          %p841 = pneg %p101
        $region38: #{tpu_custom_call.1} parent=27 // pred_check_branch
          %843 = sbr.rel (%p841) target = $region40
        $region39: #{tpu_custom_call.1} parent=27 // pred_region
          %s845 = ssub.s32 512, 512
          %846 = vsyncadd %s837, %s845
          %s847 = smul.addr %s25, 2
          %s848 = smul.addr %s24, 8
          %s849 = sadd.s32 %s847, %s848
          %s850 = smul.addr %s849, 64
          %s851 = scalar_lea.hbm %s2, %s850
          %s852 = sshll.u32 %s840, 4
          %s853 = int_to_ptr.vmem [resolvable:$true] %s852
          %858 = dma.vmem_to_hbm [thread:$0]  %s853, 512, %s851, %s837, 128, 128, 8
        $region40: #{tpu_custom_call.1} parent=27 // pred_fallthru
          _
      $region28: #{tpu_custom_call.1} parent=5 // pred_fallthru
        _
      %p859 = scmp.le.s32.totalorder 2, %s15
      // Predicated region
      $region41: #{tpu_custom_call.1} parent=5 // pred_check
        %p860 = pneg %p859
      $region42: #{tpu_custom_call.1} parent=5 // pred_check_branch
        %862 = sbr.rel (%p860) target = $region44
      $region43: #{tpu_custom_call.1} parent=5 // pred_region
        %s863 = ssub.s32 %s15, 2
        // Predicated region
        $region45: #{tpu_custom_call.1} parent=43 // pred_check
          %p864 = pneg %p107
        $region46: #{tpu_custom_call.1} parent=43 // pred_check_branch
          %866 = sbr.rel (%p864) target = $region48
        $region47: #{tpu_custom_call.1} parent=43 // pred_region
          %s867 = sand.u32 %s92, 1
          %s868 = scalar_lea.sflag [#allocation4], %s867
          %s869 = sand.u32 %s92, 1
          %s870 = smul.addr %s869, 32
          %s871 = scalar_lea.vmem [#allocation7], %s870
          %872 = dma.done %s868, 512
        $region48: #{tpu_custom_call.1} parent=43 // pred_fallthru
          _
      $region44: #{tpu_custom_call.1} parent=5 // pred_fallthru
        _
    $region6: #{tpu_custom_call.1} parent=1 // loop_footer
      %s19 = sadd.s32 1, %s15
    $region7: #{tpu_custom_call.1} parent=1 // loop_footer_branch
      %14 = sbr.rel target = $region3
    $region8: #{tpu_custom_call.1} parent=1 // loop_exit
      _
    %873 = vsyncpa [#allocation3], 1
    %s874 = scalar_lea.sflag [#allocation3], 1
    %875 = vsyncpa %s874, 1
    %876 = vsyncpa [#allocation6], 1
    %s877 = scalar_lea.sflag [#allocation6], 1
    %878 = vsyncpa %s877, 1
    %879 = vsyncpa [#allocation4], 1
    %s880 = scalar_lea.sflag [#allocation4], 1
    %881 = vsyncpa %s880, 1

</llo_original>
